<compile_context>
chip_gen: v7x
topology: tpu7x:2x2x1
jax: 0.10.0
libtpu: 0.0.40
codegen_flags: <defaults>
</compile_context>

<pallas_src>
import jax
import jax.numpy as jnp
from jax.experimental import pallas as pl
from jax.experimental.pallas import tpu as pltpu


def _nconv_kernel(at_ref, x_ref, o_ref):
    # at_ref: (Wr, V)  VMEM-resident across the grid (constant block index).
    # x_ref:  (V, TN)  lane tile of the flattened N*C*L axis.
    # o_ref:  (Wr, TN) lane-dense output tile (unmasked vst, TN % 128 == 0).
    o_ref[...] = jnp.dot(
        at_ref[...], x_ref[...], preferred_element_type=jnp.float32
    ).astype(o_ref.dtype)


def _nconv_lane_dense(at, x2, out_dtype, *, lane_tile, vmem_limit_bytes):
    """(Wr, V) @ (V, total) -> (Wr, total) via a single lane-tiled pallas_call."""
    Wr, V = at.shape
    V2, total = x2.shape
    assert V == V2

    in_itemsize = jnp.dtype(x2.dtype).itemsize
    out_itemsize = jnp.dtype(out_dtype).itemsize

    # Size the lane tile against a conservative double-buffered VMEM working
    # set (x-in + out columns).  12 MiB fits every generation once the scoped
    # limit below is raised (v5e/v6e: 128 MiB physical, v7x: 64 MiB physical /
    # 32 MiB scoped).
    budget = 12 * 1024 * 1024
    bytes_per_lane = 2 * (V * in_itemsize + Wr * out_itemsize)
    max_lanes = max(128, (budget // bytes_per_lane) // 128 * 128)
    tile_n = max(128, (min(lane_tile, max_lanes) // 128) * 128)
    tile_n = min(tile_n, pl.cdiv(total, 128) * 128)
    # v7x megacore: the single "parallel" axis is the only thing sharding work
    # across the two TensorCores -> ensure >= 2 grid steps whenever possible.
    if total > 128 and pl.cdiv(total, tile_n) < 2:
        tile_n = min(tile_n, pl.cdiv(pl.cdiv(total, 2), 128) * 128)

    grid = (pl.cdiv(total, tile_n),)

    cost = pl.CostEstimate(
        flops=2 * Wr * V * total,
        transcendentals=0,
        bytes_accessed=(V * total + Wr * V) * in_itemsize
        + Wr * total * out_itemsize,
    )

    return pl.pallas_call(
        _nconv_kernel,
        out_shape=jax.ShapeDtypeStruct((Wr, total), out_dtype),
        grid_spec=pltpu.PrefetchScalarGridSpec(
            num_scalar_prefetch=0,
            grid=grid,
            in_specs=[
                # A^T: constant block index -> DMA'd once, stays VMEM-resident.
                # TODO(synk): pipeline_mode=pl.Buffered(1) would drop its second
                # buffer (~Wr*V*itemsize); negligible at these sizes.
                pl.BlockSpec((Wr, V), lambda j: (0, 0)),
                # x2: full V (K) dim, lane-tiled N*C*L axis.  The ragged last
                # block is clipped/masked by Pallas; out-of-range lanes only
                # feed output lanes that are masked on the store (there is no
                # reduction over the lane axis), so no jnp.pad / output slice.
                pl.BlockSpec((V, tile_n), lambda j: (0, j)),
            ],
            out_specs=pl.BlockSpec((Wr, tile_n), lambda j: (0, j)),
        ),
        compiler_params=pltpu.CompilerParams(
            dimension_semantics=("parallel",),
            vmem_limit_bytes=vmem_limit_bytes,
            # Let XLA fuse the wrapper transpose/reshape/cast producing x2 into
            # the Pallas input read instead of materializing it in HBM.
            allow_input_fusion=[False, True],
        ),
        cost_estimate=cost,
    )(at, x2)


def _compute_dtype(x_dtype, cast_to_bf16):
    # HBM-bandwidth bound kernel: bf16 MXU operands (f32 accumulation) roughly
    # halve traffic on all generations and avoid v5e's f32 MXU decomposition.
    if cast_to_bf16 and jnp.dtype(x_dtype) == jnp.dtype(jnp.float32):
        return jnp.bfloat16
    return x_dtype


def nconv(x, A, *, lane_tile=2048, cast_to_bf16=True,
          vmem_limit_bytes=32 * 1024 * 1024):
    """einsum('ncvl,vw->ncwl', x, A) on TPU via Pallas.

    x: (N, C, V, L), A: (V, W) -> (N, C, W, L); output dtype follows x.
    cast_to_bf16=True feeds the MXU bf16 operands (f32 accumulation); set
    False for f32-precision operands matching the reference bit-closely.
    """
    N, C, V, L = x.shape
    V2, W = A.shape
    assert V == V2, "A's first dim must match x's node dim V"
    out_dtype = x.dtype
    cdt = _compute_dtype(x.dtype, cast_to_bf16)

    total = N * C * L
    # Lane-dense layout plumbing (fused into the kernel input read via
    # allow_input_fusion): x -> (V, N*C*L), A -> A^T (W, V).  Both operands
    # are cast explicitly to the same MXU input dtype.
    x2 = jnp.transpose(x, (2, 0, 1, 3)).reshape(V, total).astype(cdt)
    at = A.T.astype(cdt)

    out2 = _nconv_lane_dense(at, x2, out_dtype,
                             lane_tile=lane_tile,
                             vmem_limit_bytes=vmem_limit_bytes)
    # (W, N*C*L) -> (N, C, W, L); already contiguous in JAX (no-op for
    # torch's .contiguous()).
    return out2.reshape(W, N, C, L).transpose(1, 2, 0, 3)


def nconv_multi(x, As, *, lane_tile=2048, cast_to_bf16=True,
                vmem_limit_bytes=32 * 1024 * 1024):
    """Fused nconv over multiple adjacency supports (Graph WaveNet uses 2-3).

    Stacks the transposed supports into one (sum(W_i), V) operand so the
    dominant HBM stream (x) is read once instead of len(As) times.
    Returns a list of (N, C, W_i, L) arrays.
    """
    N, C, V, L = x.shape
    out_dtype = x.dtype
    cdt = _compute_dtype(x.dtype, cast_to_bf16)

    total = N * C * L
    x2 = jnp.transpose(x, (2, 0, 1, 3)).reshape(V, total).astype(cdt)
    ws, ats = [], []
    for A in As:
        V2, W = A.shape
        assert V == V2, "each A's first dim must match x's node dim V"
        ws.append(W)
        ats.append(A.T.astype(cdt))
    at = jnp.concatenate(ats, axis=0)          # (sum W_i, V)

    out2 = _nconv_lane_dense(at, x2, out_dtype,
                             lane_tile=lane_tile,
                             vmem_limit_bytes=vmem_limit_bytes)
    outs, row = [], 0
    for W in ws:
        outs.append(out2[row:row + W].reshape(W, N, C, L).transpose(1, 2, 0, 3))
        row += W
    return outs


if __name__ == "__main__":
    # Small shapes consistent with Graph WaveNet's nconv:
    # batch N=2, channels C=4, nodes V=W=16, sequence length L=16
    N, C, V, L = 2, 4, 16, 16
    W = V  # adjacency is (num_nodes, num_nodes)

    key = jax.random.PRNGKey(0)
    kx, ka, ka2 = jax.random.split(key, 3)
    x = jax.random.normal(kx, (N, C, V, L), dtype=jnp.float32)
    A = jax.random.normal(ka, (V, W), dtype=jnp.float32)

    ref = jnp.einsum("ncvl,vw->ncwl", x, A)

    # 1) f32-operand path (matches the einsum reference tightly).
    out_f32 = jax.block_until_ready(nconv(x, A, cast_to_bf16=False))
    assert out_f32.shape == (N, C, W, L)
    assert jnp.allclose(out_f32, ref, atol=1e-4, rtol=1e-4)

    # 2) Default fast path: bf16 MXU operands, f32 accumulation (lossy vs f32).
    out_fast = jax.block_until_ready(nconv(x, A))
    assert out_fast.shape == (N, C, W, L)
    assert out_fast.dtype == x.dtype
    assert jnp.allclose(out_fast, ref, atol=1.5e-1, rtol=5e-2)

    # 3) Fused multi-support path (x read once for several adjacencies).
    A2 = jax.random.normal(ka2, (V, W), dtype=jnp.float32)
    outs = nconv_multi(x, [A, A2], cast_to_bf16=False)
    refs = [ref, jnp.einsum("ncvl,vw->ncwl", x, A2)]
    for o, r in zip(outs, refs):
        o = jax.block_until_ready(o)
        assert o.shape == (N, C, W, L)
        assert jnp.allclose(o, r, atol=1e-4, rtol=1e-4)

    print("KERNEL_OK")
</pallas_src>

<mosaic_0001>
module attributes {stable_mosaic.version = 11 : i64} {
  func.func @_nconv_kernel(%arg0: i32, %arg1: memref<16x16xf32, #tpu.memory_space<vmem>>, %arg2: memref<16x128xf32, #tpu.memory_space<vmem>>, %arg3: memref<16x128xf32, #tpu.memory_space<vmem>>) attributes {dimension_semantics = [#tpu.dimension_semantics<parallel>], iteration_bounds = array<i64: 1>, scalar_prefetch = 0 : i64, scratch_operands = 0 : i64, tpu.core_type = #tpu.core_type<tc>, window_params = [{pipeline_mode = #tpu.pipeline_mode<synchronous>, transform_indices = @transform_0, window_bounds = array<i64: 16, 16>}, {transform_indices = @transform_1, window_bounds = array<i64: 16, 128>}, {transform_indices = @transform_2, window_bounds = array<i64: 16, 128>}]} {
    %c0 = arith.constant 0 : index
    %c0_0 = arith.constant 0 : index
    %0 = vector.load %arg1[%c0, %c0_0] : memref<16x16xf32, #tpu.memory_space<vmem>>, vector<16x16xf32>
    %c0_1 = arith.constant 0 : index
    %c0_2 = arith.constant 0 : index
    %1 = vector.load %arg2[%c0_1, %c0_2] : memref<16x128xf32, #tpu.memory_space<vmem>>, vector<16x128xf32>
    %cst = arith.constant dense<0.000000e+00> : vector<16x128xf32>
    %2 = tpu.matmul %0, %1, %cst {dimension_numbers = #tpu.dot_dimension_numbers<[1], [0], [0], [1], [0, 0, 1, 1], [], []>} : vector<16x16xf32>, vector<16x128xf32>, vector<16x128xf32> -> vector<16x128xf32>
    %c0_3 = arith.constant 0 : index
    %c0_4 = arith.constant 0 : index
    %3 = vector.load %arg3[%c0_3, %c0_4] : memref<16x128xf32, #tpu.memory_space<vmem>>, vector<16x128xf32>
    tpu.vector_store %arg3[%c0_3, %c0_4], %2 {strides = array<i32>} : memref<16x128xf32, #tpu.memory_space<vmem>>, vector<16x128xf32>,
    return
  }
  func.func @transform_0(%arg0: i32) -> (i32, i32) {
    %c0_i32 = arith.constant 0 : i32
    %c0_i32_0 = arith.constant 0 : i32
    %c0_i32_1 = arith.constant 0 : i32
    return %c0_i32, %c0_i32_0 : i32, i32
  }
  func.func @transform_1(%arg0: i32) -> (i32, i32) {
    %c0_i32 = arith.constant 0 : i32
    %c0_i32_0 = arith.constant 0 : i32
    return %c0_i32, %arg0 : i32, i32
  }
  func.func @transform_2(%arg0: i32) -> (i32, i32) {
    %c0_i32 = arith.constant 0 : i32
    %c0_i32_0 = arith.constant 0 : i32
    return %c0_i32, %arg0 : i32, i32
  }
}

</mosaic_0001>

<llo_original>
// kernel: tpu_custom_call.1
$region0: #{tpu_custom_call.1}
  #allocation0 [shape = 'u32[]', space=smem, size = 0x4, offset = 0x4, fixed_abs, tag = 'smem constant byte address 0x4 - core index']
  #allocation1 [shape = 'u32[144,128]{1,0:T(1,128)}', space=vmem, size = 0x12000, scoped, tag = 'internal scratch']
  %s0 = inlined_call_operand.hbm [shape: f32[16,16], index: 0, kind: input, shape index: {}]
  %s1 = inlined_call_operand.hbm [shape: f32[16,128], index: 1, kind: input, shape index: {}]
  %s2 = inlined_call_operand.hbm [shape: f32[16,128], index: 2, kind: output, shape index: {}]
  %s3 = sld [smem:[#allocation0]]
  $region26: #{tpu_custom_call.1} parent=0
    _
  %s5 = ssub.s32 1, %s3
  %s6 = scalar_select 0, %s5, %s3
  $region1: #{tpu_custom_call.1} parent=0
    #allocation2 [shape = 'u8[8192]{0}', space=vmem, size = 0x2000, scoped, tag = 'input window, operand 0, single buffered']
    #allocation3 [shape = 's32[1]{0}', space=sflag, size = 0x4, scoped, tag = 'scoped memory for tpu_custom_call.1']
    #allocation4 [shape = 's32[1]{0}', space=sflag, size = 0x4, scoped, tag = 'scoped memory for tpu_custom_call.1']
    #allocation5 [shape = 'u8[8192]{0}', space=vmem, size = 0x2000, scoped, tag = 'input window, operand 1, single buffered']
    #allocation6 [shape = 's32[1]{0}', space=sflag, size = 0x4, scoped, tag = 'scoped memory for tpu_custom_call.1']
    #allocation7 [shape = 'u8[8192]{0}', space=vmem, size = 0x2000, scoped, tag = 'output window, operand 0, single buffered']
    %7 = vsyncpa [#allocation3], 0
    %8 = vsyncpa [#allocation6], 0
    %9 = vsyncpa [#allocation4], 0
    // Predicated region
    $region2: #{tpu_custom_call.1} parent=1 // pred_check
      _
    $region3: #{tpu_custom_call.1} parent=1 // pred_check_branch
      %11 = sbr.rel (0) target = $region5
    $region4: #{tpu_custom_call.1} parent=1 // pred_region
      %s13 = ssub.s32 256, 256
      %14 = vsyncadd [#allocation3], %s13
      %s15 = sshll.u32 [#allocation2], 4
      %s16 = int_to_ptr.vmem [resolvable:$true] %s15
      %21 = dma.hbm_to_vmem [thread:$0]  %s0, 256, %s16, [#allocation3], 128, 128, 8
    $region5: #{tpu_custom_call.1} parent=1 // pred_fallthru
      _
    // Predicated region
    $region6: #{tpu_custom_call.1} parent=1 // pred_check
      _
    $region7: #{tpu_custom_call.1} parent=1 // pred_check_branch
      %23 = sbr.rel (0) target = $region9
    $region8: #{tpu_custom_call.1} parent=1 // pred_region
      %s25 = ssub.s32 256, 256
      %26 = vsyncadd [#allocation6], %s25
      %s27 = sshll.u32 [#allocation5], 4
      %s28 = int_to_ptr.vmem [resolvable:$true] %s27
      %33 = dma.hbm_to_vmem [thread:$0]  %s1, 256, %s28, [#allocation6], 128, 128, 8
    $region9: #{tpu_custom_call.1} parent=1 // pred_fallthru
      _
    // Predicated region
    $region10: #{tpu_custom_call.1} parent=1 // pred_check
      _
    $region11: #{tpu_custom_call.1} parent=1 // pred_check_branch
      %35 = sbr.rel (0) target = $region13
    $region12: #{tpu_custom_call.1} parent=1 // pred_region
      %36 = dma.done [#allocation3], 256
    $region13: #{tpu_custom_call.1} parent=1 // pred_fallthru
      _
    // Predicated region
    $region14: #{tpu_custom_call.1} parent=1 // pred_check
      _
    $region15: #{tpu_custom_call.1} parent=1 // pred_check_branch
      %38 = sbr.rel (0) target = $region17
    $region16: #{tpu_custom_call.1} parent=1 // pred_region
      %39 = dma.done [#allocation6], 256
    $region17: #{tpu_custom_call.1} parent=1 // pred_fallthru
      _
    %v40 = vld [vmem:[#allocation2] sm:$0xff]
    %v41 = vld [vmem:[#allocation2 + $0x8] sm:$0xff]
    %v42 = vld [vmem:[#allocation5] sm:$0xff]
    %v43 = vld [vmem:[#allocation5 + $0x8] sm:$0xff]
    %vm44 = vcmask 130048
    %v46 = vsel %vm44, %v40, 0
    %v49 = vsel %vm44, %v41, 0
    %51 = vmatprep.subr.mxu0 0.0
    %52 = vmatpush1.msra.mxu0 %v42
    %53 = vmatprep.subr.mxu0 0.0
    %54 = vmatpush1.msra.mxu0 %v43
    %55 = vmatprep.subr.mxu0 0.0
    %56 = vmatpush1.msra.mxu0 0.0
    %57 = vmatprep.subr.mxu0 0.0
    %58 = vmatpush1.msra.mxu0 0.0
    %59 = vmatprep.subr.mxu0 0.0
    %60 = vmatpush1.msra.mxu0 0.0
    %61 = vmatprep.subr.mxu0 0.0
    %62 = vmatpush1.msra.mxu0 0.0
    %63 = vmatprep.subr.mxu0 0.0
    %64 = vmatpush1.msra.mxu0 0.0
    %65 = vmatprep.subr.mxu0 0.0
    %66 = vmatpush1.msra.mxu0 0.0
    %67 = vmatprep.subr.mxu0 0.0
    %68 = vmatpush1.msra.mxu0 0.0
    %69 = vmatprep.subr.mxu0 0.0
    %70 = vmatpush1.msra.mxu0 0.0
    %71 = vmatprep.subr.mxu0 0.0
    %72 = vmatpush1.msra.mxu0 0.0
    %73 = vmatprep.subr.mxu0 0.0
    %74 = vmatpush1.msra.mxu0 0.0
    %75 = vmatprep.subr.mxu0 0.0
    %76 = vmatpush1.msra.mxu0 0.0
    %77 = vmatprep.subr.mxu0 0.0
    %78 = vmatpush1.msra.mxu0 0.0
    %79 = vmatprep.subr.mxu0 0.0
    %80 = vmatpush1.msra.mxu0 0.0
    %81 = vmatprep.subr.mxu0 0.0
    %82 = vmatpush1.msra.mxu0 0.0
    %83 = vmatprep.subr.mxu0 0.0
    %84 = vmatpush1.msra.mxu0 0.0
    %85 = vmatprep.subr.mxu0 0.0
    %86 = vmatpush1.msra.mxu0 0.0
    %87 = vmatprep.subr.mxu0 0.0
    %88 = vmatpush1.msra.mxu0 0.0
    %89 = vmatprep.subr.mxu0 0.0
    %90 = vmatpush1.msra.mxu0 0.0
    %91 = vmatprep.subr.mxu0 0.0
    %92 = vmatpush1.msra.mxu0 0.0
    %93 = vmatprep.subr.mxu0 0.0
    %94 = vmatpush1.msra.mxu0 0.0
    %95 = vmatprep.subr.mxu0 0.0
    %96 = vmatpush1.msra.mxu0 0.0
    %97 = vmatprep.subr.mxu0 0.0
    %98 = vmatpush1.msra.mxu0 0.0
    %99 = vmatprep.subr.mxu0 0.0
    %100 = vmatpush1.msra.mxu0 0.0
    %101 = vmatprep.subr.mxu0 0.0
    %102 = vmatpush1.msra.mxu0 0.0
    %103 = vmatprep.subr.mxu0 0.0
    %104 = vmatpush1.msra.mxu0 0.0
    %105 = vmatprep.subr.mxu0 0.0
    %106 = vmatpush1.msra.mxu0 0.0
    %107 = vmatprep.subr.mxu0 0.0
    %108 = vmatpush1.msra.mxu0 0.0
    %109 = vmatprep.subr.mxu0 0.0
    %110 = vmatpush1.msra.mxu0 0.0
    %111 = vmatprep.subr.mxu0 0.0
    %112 = vmatpush1.msra.mxu0 0.0
    %113 = vmatprep.subr.mxu0 0.0
    %114 = vmatpush1.msra.mxu0 0.0
    %115 = vmatprep.mubr.f32.mxu0 0.0
    %116 = vmatmul.mubr.f32.gmra.mrb[0].mxu0 %v46
    %v117 = vpop.f32.mrb[0].mxu0
    %v118 = vadd.f32 0.0, %v117
    %v119 = vpop.f32.mrb[0].mxu0
    %120 = vmatprep.mubr.f32.mxu0 0.0
    %121 = vmatmul.mubr.f32.gmra.mrb[0].mxu0 %v49
    %v122 = vpop.f32.mrb[0].mxu0
    %v123 = vadd.f32 0.0, %v122
    %v124 = vpop.f32.mrb[0].mxu0
    %125 = vdwg.mxu0
    %126 = vst [vmem:[#allocation7] sm:$0xff] %v118
    %127 = vst [vmem:[#allocation7 + $0x8] sm:$0xff] %v123
    // Predicated region
    $region18: #{tpu_custom_call.1} parent=1 // pred_check
      _
    $region19: #{tpu_custom_call.1} parent=1 // pred_check_branch
      %129 = sbr.rel (0) target = $region21
    $region20: #{tpu_custom_call.1} parent=1 // pred_region
      %s131 = ssub.s32 256, 256
      %132 = vsyncadd [#allocation4], %s131
      %s133 = sshll.u32 [#allocation7], 4
      %s134 = int_to_ptr.vmem [resolvable:$true] %s133
      %139 = dma.vmem_to_hbm [thread:$0]  %s134, 256, %s2, [#allocation4], 128, 128, 8
    $region21: #{tpu_custom_call.1} parent=1 // pred_fallthru
      _
    // Predicated region
    $region22: #{tpu_custom_call.1} parent=1 // pred_check
      _
    $region23: #{tpu_custom_call.1} parent=1 // pred_check_branch
      %141 = sbr.rel (0) target = $region25
    $region24: #{tpu_custom_call.1} parent=1 // pred_region
      %142 = dma.done [#allocation4], 256
    $region25: #{tpu_custom_call.1} parent=1 // pred_fallthru
      _
    %143 = vsyncpa [#allocation3], 1
    %144 = vsyncpa [#allocation6], 1
    %145 = vsyncpa [#allocation4], 1

</llo_original>
